<compile_context>
chip_gen: v5e
topology: v5e:2x2
jax: 0.10.0
libtpu: 0.0.40
codegen_flags: <defaults>
</compile_context>

<pallas_src>
import functools

import jax
import jax.numpy as jnp
from jax.experimental import pallas as pl
from jax.experimental.pallas import tpu as pltpu

LANE = 128


def _round_up(x, m):
    return (x + m - 1) // m * m


def _pad2(a, rows, cols):
    return jnp.pad(a, ((0, rows - a.shape[0]), (0, cols - a.shape[1])))


# --------------------------------------------------------------------------- #
# Kernel
# --------------------------------------------------------------------------- #
def _policy_kernel(obs_ref, gum_ref, w1_ref, b1_ref, w2_ref, b2_ref,
                   wh_ref, bh_ref, action_ref, value_ref, logprob_ref,
                   *, action_size):
    A = action_size

    x = obs_ref[...]                                          # (F_pad, TM) bf16

    # fnn: Linear + ReLU   (h1^T = W1^T x^T + b1)
    h1 = jnp.dot(w1_ref[...], x, preferred_element_type=jnp.float32) + b1_ref[...]
    h1 = jnp.maximum(h1, 0.0)                                 # (H_pad, TM) f32

    # fnn2: Linear + ReLU
    h2 = jnp.dot(w2_ref[...], h1.astype(jnp.bfloat16),
                 preferred_element_type=jnp.float32) + b2_ref[...]
    h2 = jnp.maximum(h2, 0.0)                                 # (H2_pad, TM) f32

    # fused actor||critic head: rows 0..A-1 = actor logits, row A = critic value
    y = jnp.dot(wh_ref[...], h2.astype(jnp.bfloat16),
                preferred_element_type=jnp.float32) + bh_ref[...]   # (HEAD_pad, TM)

    logits = y[:A, :]                                         # (A, TM) f32
    value = y[A:A + 1, :]                                     # (1, TM) f32

    # Categorical(logits).sample() via Gumbel-max (noise supplied from host).
    z = logits + gum_ref[...]                                 # (A, TM) f32
    ids_f = jax.lax.broadcasted_iota(jnp.int32, z.shape, 0).astype(jnp.float32)
    zmax = jnp.max(z, axis=0, keepdims=True)                  # (1, TM)
    action_f = jnp.min(jnp.where(z >= zmax, ids_f, float(A)),
                       axis=0, keepdims=True)                 # (1, TM) min idx of ties

    # Categorical(logits).log_prob(action) = log_softmax(logits)[action]
    lmax = jnp.max(logits, axis=0, keepdims=True)
    lse = jnp.log(jnp.sum(jnp.exp(logits - lmax), axis=0, keepdims=True)) + lmax
    sel = ids_f == action_f
    logit_sel = jnp.sum(jnp.where(sel, logits, 0.0), axis=0, keepdims=True)
    logprob = logit_sel - lse                                 # (1, TM)

    action_ref[...] = action_f.astype(jnp.int32)
    value_ref[...] = value
    logprob_ref[...] = logprob


# --------------------------------------------------------------------------- #
# Wrapper
# --------------------------------------------------------------------------- #
@jax.jit
def fnn_policy_forward(obs, kernel_params, gumbel):
    """obs: (T, N, obs_size) f32, gumbel: (T, N, action_size) f32.
    Returns (action (T,N) int32, value (T,N,1) f32, log_prob (T,N) f32) matching
    the PyTorch discrete-action forward()."""
    w1t, b1, w2t, b2, wht, bh = kernel_params
    T, N, F = obs.shape
    A = gumbel.shape[-1]
    M = T * N

    H_pad, F_pad = w1t.shape
    H2_pad = w2t.shape[0]
    HEAD_pad = wht.shape[0]

    # Row-tile size: lane-multiple, >=512 rows when the batch is large enough
    # (big enough to hide per-step overhead, small enough for v7x's 64 MiB VMEM).
    TM = max(LANE, min(512, _round_up(M, LANE)))
    M_pad = _round_up(M, TM)
    grid = (M_pad // TM,)

    # Batch-on-lanes layout: obs^T (F_pad, M_pad) bf16, gumbel^T (A, M_pad) f32.
    obs_t = jnp.pad(obs.reshape(M, F),
                    ((0, M_pad - M), (0, F_pad - F))).T.astype(jnp.bfloat16)
    gum_t = jnp.pad(gumbel.reshape(M, A).astype(jnp.float32),
                    ((0, M_pad - M), (0, 0))).T

    kernel = functools.partial(_policy_kernel, action_size=A)

    action, value, log_prob = pl.pallas_call(
        kernel,
        grid=grid,
        in_specs=[
            pl.BlockSpec((F_pad, TM), lambda i: (0, i)),        # obs^T tile
            pl.BlockSpec((A, TM), lambda i: (0, i)),            # gumbel^T tile
            pl.BlockSpec((H_pad, F_pad), lambda i: (0, 0)),     # W1^T  (resident)
            pl.BlockSpec((H_pad, 1), lambda i: (0, 0)),         # b1
            pl.BlockSpec((H2_pad, H_pad), lambda i: (0, 0)),    # W2^T
            pl.BlockSpec((H2_pad, 1), lambda i: (0, 0)),        # b2
            pl.BlockSpec((HEAD_pad, H2_pad), lambda i: (0, 0)), # [Wa||Wc]^T
            pl.BlockSpec((HEAD_pad, 1), lambda i: (0, 0)),      # [ba||bc]^T
        ],
        out_specs=(
            pl.BlockSpec((1, TM), lambda i: (0, i)),            # action (lane-dense)
            pl.BlockSpec((1, TM), lambda i: (0, i)),            # value
            pl.BlockSpec((1, TM), lambda i: (0, i)),            # log_prob
        ),
        out_shape=(
            jax.ShapeDtypeStruct((1, M_pad), jnp.int32),
            jax.ShapeDtypeStruct((1, M_pad), jnp.float32),
            jax.ShapeDtypeStruct((1, M_pad), jnp.float32),
        ),
        compiler_params=pltpu.CompilerParams(
            dimension_semantics=("parallel",),
            vmem_limit_bytes=32 * 1024 * 1024,
        ),
    )(obs_t, gum_t, w1t, b1, w2t, b2, wht, bh)

    return (action[0, :M].reshape(T, N),
            value[0, :M].reshape(T, N, 1),
            log_prob[0, :M].reshape(T, N))


# --------------------------------------------------------------------------- #
# Params
# --------------------------------------------------------------------------- #
def init_params(key, obs_size, hidden_size, hidden_size_2, action_size):
    """PyTorch-style uniform fan-in init; weights stored as (in, out)."""
    def linear(k, fan_in, fan_out):
        kw, kb = jax.random.split(k)
        bound = 1.0 / jnp.sqrt(fan_in)
        w = jax.random.uniform(kw, (fan_in, fan_out), jnp.float32, -bound, bound)
        b = jax.random.uniform(kb, (1, fan_out), jnp.float32, -bound, bound)
        return w, b

    k1, k2, k3, k4 = jax.random.split(key, 4)
    w1, b1 = linear(k1, obs_size, hidden_size)
    w2, b2 = linear(k2, hidden_size, hidden_size_2)
    wa, ba = linear(k3, hidden_size_2, action_size)
    wc, bc = linear(k4, hidden_size_2, 1)
    return (w1, b1, w2, b2, wa, ba, wc, bc)


def prepare_params(params):
    """One-time host prep: fuse actor||critic, transpose to (out, in), zero-pad
    to lane/sublane multiples, cast weights to bf16 (biases stay f32)."""
    w1, b1, w2, b2, wa, ba, wc, bc = params
    F, H = w1.shape
    H2 = w2.shape[1]
    A = wa.shape[1]
    F_pad, H_pad, H2_pad = _round_up(F, LANE), _round_up(H, LANE), _round_up(H2, LANE)
    HEAD_pad = _round_up(A + 1, 8)

    wh = jnp.concatenate([wa, wc], axis=1)          # (H2, A+1)
    bh = jnp.concatenate([ba, bc], axis=1)          # (1, A+1)

    w1t = _pad2(w1.T, H_pad, F_pad).astype(jnp.bfloat16)
    w2t = _pad2(w2.T, H2_pad, H_pad).astype(jnp.bfloat16)
    wht = _pad2(wh.T, HEAD_pad, H2_pad).astype(jnp.bfloat16)

    b1p = _pad2(b1.T, H_pad, 1).astype(jnp.float32)
    b2p = _pad2(b2.T, H2_pad, 1).astype(jnp.float32)
    bhp = _pad2(bh.T, HEAD_pad, 1).astype(jnp.float32)
    return (w1t, b1p, w2t, b2p, wht, bhp)


# --------------------------------------------------------------------------- #
# Pure-JAX reference (same bf16-rounded operands as the kernel)
# --------------------------------------------------------------------------- #
def reference_forward(obs, kernel_params, gumbel):
    w1t, b1, w2t, b2, wht, bh = kernel_params
    T, N, F = obs.shape
    M = T * N
    A = gumbel.shape[-1]
    F_pad = w1t.shape[1]
    f32 = jnp.float32

    x = jnp.pad(obs.reshape(M, F), ((0, 0), (0, F_pad - F)))
    x = x.astype(jnp.bfloat16).astype(f32)
    w1 = w1t.astype(f32).T
    w2 = w2t.astype(f32).T
    wh = wht.astype(f32).T

    h1 = jnp.maximum(x @ w1 + b1[:, 0][None, :], 0.0)
    h2 = jnp.maximum(h1.astype(jnp.bfloat16).astype(f32) @ w2 + b2[:, 0][None, :], 0.0)
    y = h2.astype(jnp.bfloat16).astype(f32) @ wh + bh[:, 0][None, :]

    logits = y[:, :A]
    value = y[:, A:A + 1]
    z = logits + gumbel.reshape(M, A).astype(f32)
    ids = jnp.arange(A)[None, :]
    action = jnp.min(jnp.where(z >= z.max(axis=-1, keepdims=True), ids, A), axis=-1)
    logp = logits - jax.scipy.special.logsumexp(logits, axis=-1, keepdims=True)
    return action.astype(jnp.int32), value, logp


# --------------------------------------------------------------------------- #
if __name__ == "__main__":
    OBS, HID, HID2, ACT = 16, 32, 32, 4

    key = jax.random.PRNGKey(0)
    k_par, k_small, k_big = jax.random.split(key, 3)

    params = init_params(k_par, OBS, HID, HID2, ACT)
    kparams = prepare_params(params)

    def run_case(k, T, N, check_action):
        k_obs, k_gum = jax.random.split(k)
        obs = jax.random.normal(k_obs, (T, N, OBS), jnp.float32)
        u = jax.random.uniform(k_gum, (T, N, ACT), jnp.float32, 1e-6, 1.0 - 1e-6)
        gumbel = -jnp.log(-jnp.log(u))

        action, value, log_prob = fnn_policy_forward(obs, kparams, gumbel)
        jax.block_until_ready((action, value, log_prob))

        assert action.shape == (T, N) and action.dtype == jnp.int32
        assert value.shape == (T, N, 1) and value.dtype == jnp.float32
        assert log_prob.shape == (T, N) and log_prob.dtype == jnp.float32

        M = T * N
        ref_action, ref_value, ref_logp = reference_forward(obs, kparams, gumbel)
        assert bool(jnp.allclose(value.reshape(M, 1), ref_value, atol=1e-3, rtol=1e-3))
        lp_ref = jnp.take_along_axis(ref_logp, action.reshape(M, 1), axis=-1)[:, 0]
        assert bool(jnp.allclose(log_prob.reshape(M), lp_ref, atol=1e-3, rtol=1e-3))
        assert bool(jnp.all((action >= 0) & (action < ACT)))
        assert bool(jnp.all(log_prob <= 1e-5))
        if check_action:
            assert bool(jnp.all(action.reshape(M) == ref_action))

    # Small, module-consistent shapes: M = 8 rows -> TM = 128, grid = (1,)
    run_case(k_small, T=2, N=4, check_action=True)
    # Larger rollout: M = 1024 rows -> TM = 512, grid = (2,), exercises pipelining
    run_case(k_big, T=64, N=16, check_action=False)

    print("KERNEL_OK")
</pallas_src>

<mosaic_0001>
module attributes {stable_mosaic.version = 11 : i64} {
  func.func @_policy_kernel(%arg0: i32, %arg1: memref<128x128xbf16, #tpu.memory_space<vmem>>, %arg2: memref<4x128xf32, #tpu.memory_space<vmem>>, %arg3: memref<128x128xbf16, #tpu.memory_space<vmem>>, %arg4: memref<128x1xf32, #tpu.memory_space<vmem>>, %arg5: memref<128x128xbf16, #tpu.memory_space<vmem>>, %arg6: memref<128x1xf32, #tpu.memory_space<vmem>>, %arg7: memref<8x128xbf16, #tpu.memory_space<vmem>>, %arg8: memref<8x1xf32, #tpu.memory_space<vmem>>, %arg9: memref<1x128xi32, #tpu.memory_space<vmem>>, %arg10: memref<1x128xf32, #tpu.memory_space<vmem>>, %arg11: memref<1x128xf32, #tpu.memory_space<vmem>>) attributes {dimension_semantics = [#tpu.dimension_semantics<parallel>], iteration_bounds = array<i64: 1>, scalar_prefetch = 0 : i64, scratch_operands = 0 : i64, tpu.core_type = #tpu.core_type<tc>, window_params = [{transform_indices = @transform_0, window_bounds = array<i64: 128, 128>}, {transform_indices = @transform_1, window_bounds = array<i64: 4, 128>}, {pipeline_mode = #tpu.pipeline_mode<synchronous>, transform_indices = @transform_2, window_bounds = array<i64: 128, 128>}, {pipeline_mode = #tpu.pipeline_mode<synchronous>, transform_indices = @transform_3, window_bounds = array<i64: 128, 1>}, {pipeline_mode = #tpu.pipeline_mode<synchronous>, transform_indices = @transform_4, window_bounds = array<i64: 128, 128>}, {pipeline_mode = #tpu.pipeline_mode<synchronous>, transform_indices = @transform_5, window_bounds = array<i64: 128, 1>}, {pipeline_mode = #tpu.pipeline_mode<synchronous>, transform_indices = @transform_6, window_bounds = array<i64: 8, 128>}, {pipeline_mode = #tpu.pipeline_mode<synchronous>, transform_indices = @transform_7, window_bounds = array<i64: 8, 1>}, {transform_indices = @transform_8, window_bounds = array<i64: 1, 128>}, {transform_indices = @transform_9, window_bounds = array<i64: 1, 128>}, {transform_indices = @transform_10, window_bounds = array<i64: 1, 128>}]} {
    %c0 = arith.constant 0 : index
    %c0_0 = arith.constant 0 : index
    %0 = vector.load %arg1[%c0, %c0_0] : memref<128x128xbf16, #tpu.memory_space<vmem>>, vector<128x128xbf16>
    %c0_1 = arith.constant 0 : index
    %c0_2 = arith.constant 0 : index
    %1 = vector.load %arg3[%c0_1, %c0_2] : memref<128x128xbf16, #tpu.memory_space<vmem>>, vector<128x128xbf16>
    %cst = arith.constant dense<0.000000e+00> : vector<128x128xf32>
    %2 = tpu.matmul %1, %0, %cst {dimension_numbers = #tpu.dot_dimension_numbers<[1], [0], [0], [1], [0, 0, 1, 1], [], []>} : vector<128x128xbf16>, vector<128x128xbf16>, vector<128x128xf32> -> vector<128x128xf32>
    %c0_3 = arith.constant 0 : index
    %c0_4 = arith.constant 0 : index
    %3 = vector.load %arg4[%c0_3, %c0_4] : memref<128x1xf32, #tpu.memory_space<vmem>>, vector<128x1xf32>
    %4 = vector.broadcast %3 : vector<128x1xf32> to vector<128x128xf32>
    %5 = arith.addf %2, %4 : vector<128x128xf32>
    %cst_5 = arith.constant 0.000000e+00 : f32
    %6 = vector.broadcast %cst_5 : f32 to vector<128x128xf32>
    %7 = arith.maximumf %5, %6 : vector<128x128xf32>
    %c0_6 = arith.constant 0 : index
    %c0_7 = arith.constant 0 : index
    %8 = vector.load %arg5[%c0_6, %c0_7] : memref<128x128xbf16, #tpu.memory_space<vmem>>, vector<128x128xbf16>
    %9 = arith.truncf %7 : vector<128x128xf32> to vector<128x128xbf16>
    %cst_8 = arith.constant dense<0.000000e+00> : vector<128x128xf32>
    %10 = tpu.matmul %8, %9, %cst_8 {dimension_numbers = #tpu.dot_dimension_numbers<[1], [0], [0], [1], [0, 0, 1, 1], [], []>} : vector<128x128xbf16>, vector<128x128xbf16>, vector<128x128xf32> -> vector<128x128xf32>
    %c0_9 = arith.constant 0 : index
    %c0_10 = arith.constant 0 : index
    %11 = vector.load %arg6[%c0_9, %c0_10] : memref<128x1xf32, #tpu.memory_space<vmem>>, vector<128x1xf32>
    %12 = vector.broadcast %11 : vector<128x1xf32> to vector<128x128xf32>
    %13 = arith.addf %10, %12 : vector<128x128xf32>
    %cst_11 = arith.constant 0.000000e+00 : f32
    %14 = vector.broadcast %cst_11 : f32 to vector<128x128xf32>
    %15 = arith.maximumf %13, %14 : vector<128x128xf32>
    %c0_12 = arith.constant 0 : index
    %c0_13 = arith.constant 0 : index
    %16 = vector.load %arg7[%c0_12, %c0_13] : memref<8x128xbf16, #tpu.memory_space<vmem>>, vector<8x128xbf16>
    %17 = arith.truncf %15 : vector<128x128xf32> to vector<128x128xbf16>
    %cst_14 = arith.constant dense<0.000000e+00> : vector<8x128xf32>
    %18 = tpu.matmul %16, %17, %cst_14 {dimension_numbers = #tpu.dot_dimension_numbers<[1], [0], [0], [1], [0, 0, 1, 1], [], []>} : vector<8x128xbf16>, vector<128x128xbf16>, vector<8x128xf32> -> vector<8x128xf32>
    %c0_15 = arith.constant 0 : index
    %c0_16 = arith.constant 0 : index
    %19 = vector.load %arg8[%c0_15, %c0_16] : memref<8x1xf32, #tpu.memory_space<vmem>>, vector<8x1xf32>
    %20 = vector.broadcast %19 : vector<8x1xf32> to vector<8x128xf32>
    %21 = arith.addf %18, %20 : vector<8x128xf32>
    %22 = vector.extract_strided_slice %21 {offsets = [0, 0], sizes = [4, 128], strides = [1, 1]} : vector<8x128xf32> to vector<4x128xf32>
    %23 = vector.extract_strided_slice %21 {offsets = [4, 0], sizes = [1, 128], strides = [1, 1]} : vector<8x128xf32> to vector<1x128xf32>
    %c0_17 = arith.constant 0 : index
    %c0_18 = arith.constant 0 : index
    %24 = vector.load %arg2[%c0_17, %c0_18] : memref<4x128xf32, #tpu.memory_space<vmem>>, vector<4x128xf32>
    %25 = arith.addf %22, %24 : vector<4x128xf32>
    %26 = tpu.iota {dimensions = array<i32: 0>} : vector<4x128xi32>
    %27 = arith.sitofp %26 : vector<4x128xi32> to vector<4x128xf32>
    %cst_19 = arith.constant dense<0xFF800000> : vector<128xf32>
    %28 = vector.multi_reduction <maximumf>, %25, %cst_19 [0] : vector<4x128xf32> to vector<128xf32>
    %29 = vector.shape_cast %28 : vector<128xf32> to vector<1x128xf32>
    %30 = vector.broadcast %29 : vector<1x128xf32> to vector<4x128xf32>
    %31 = arith.cmpf oge, %25, %30 : vector<4x128xf32>
    %cst_20 = arith.constant 4.000000e+00 : f32
    %32 = vector.broadcast %cst_20 : f32 to vector<4x128xf32>
    %33 = arith.select %31, %27, %32 : vector<4x128xi1>, vector<4x128xf32>
    %cst_21 = arith.constant dense<0x7F800000> : vector<128xf32>
    %34 = vector.multi_reduction <minimumf>, %33, %cst_21 [0] : vector<4x128xf32> to vector<128xf32>
    %35 = vector.shape_cast %34 : vector<128xf32> to vector<1x128xf32>
    %cst_22 = arith.constant dense<0xFF800000> : vector<128xf32>
    %36 = vector.multi_reduction <maximumf>, %22, %cst_22 [0] : vector<4x128xf32> to vector<128xf32>
    %37 = vector.shape_cast %36 : vector<128xf32> to vector<1x128xf32>
    %38 = vector.broadcast %37 : vector<1x128xf32> to vector<4x128xf32>
    %39 = arith.subf %22, %38 : vector<4x128xf32>
    %40 = math.exp %39 : vector<4x128xf32>
    %cst_23 = arith.constant dense<0.000000e+00> : vector<128xf32>
    %41 = vector.multi_reduction <add>, %40, %cst_23 [0] : vector<4x128xf32> to vector<128xf32>
    %42 = vector.shape_cast %41 : vector<128xf32> to vector<1x128xf32>
    %43 = math.log %42 : vector<1x128xf32>
    %44 = arith.addf %43, %37 : vector<1x128xf32>
    %45 = vector.broadcast %35 : vector<1x128xf32> to vector<4x128xf32>
    %46 = arith.cmpf oeq, %27, %45 : vector<4x128xf32>
    %cst_24 = arith.constant 0.000000e+00 : f32
    %47 = vector.broadcast %cst_24 : f32 to vector<4x128xf32>
    %48 = arith.select %46, %22, %47 : vector<4x128xi1>, vector<4x128xf32>
    %cst_25 = arith.constant dense<0.000000e+00> : vector<128xf32>
    %49 = vector.multi_reduction <add>, %48, %cst_25 [0] : vector<4x128xf32> to vector<128xf32>
    %50 = vector.shape_cast %49 : vector<128xf32> to vector<1x128xf32>
    %51 = arith.subf %50, %44 : vector<1x128xf32>
    %52 = arith.fptosi %35 : vector<1x128xf32> to vector<1x128xi32>
    %c0_26 = arith.constant 0 : index
    %c0_27 = arith.constant 0 : index
    %53 = vector.load %arg9[%c0_26, %c0_27] : memref<1x128xi32, #tpu.memory_space<vmem>>, vector<1x128xi32>
    tpu.vector_store %arg9[%c0_26, %c0_27], %52 {strides = array<i32>} : memref<1x128xi32, #tpu.memory_space<vmem>>, vector<1x128xi32>,
    %c0_28 = arith.constant 0 : index
    %c0_29 = arith.constant 0 : index
    %54 = vector.load %arg10[%c0_28, %c0_29] : memref<1x128xf32, #tpu.memory_space<vmem>>, vector<1x128xf32>
    tpu.vector_store %arg10[%c0_28, %c0_29], %23 {strides = array<i32>} : memref<1x128xf32, #tpu.memory_space<vmem>>, vector<1x128xf32>,
    %c0_30 = arith.constant 0 : index
    %c0_31 = arith.constant 0 : index
    %55 = vector.load %arg11[%c0_30, %c0_31] : memref<1x128xf32, #tpu.memory_space<vmem>>, vector<1x128xf32>
    tpu.vector_store %arg11[%c0_30, %c0_31], %51 {strides = array<i32>} : memref<1x128xf32, #tpu.memory_space<vmem>>, vector<1x128xf32>,
    return
  }
  func.func @transform_0(%arg0: i32) -> (i32, i32) {
    %c0_i32 = arith.constant 0 : i32
    %c0_i32_0 = arith.constant 0 : i32
    return %c0_i32, %arg0 : i32, i32
  }
  func.func @transform_1(%arg0: i32) -> (i32, i32) {
    %c0_i32 = arith.constant 0 : i32
    %c0_i32_0 = arith.constant 0 : i32
    return %c0_i32, %arg0 : i32, i32
  }
  func.func @transform_2(%arg0: i32) -> (i32, i32) {
    %c0_i32 = arith.constant 0 : i32
    %c0_i32_0 = arith.constant 0 : i32
    %c0_i32_1 = arith.constant 0 : i32
    return %c0_i32, %c0_i32_0 : i32, i32
  }
  func.func @transform_3(%arg0: i32) -> (i32, i32) {
    %c0_i32 = arith.constant 0 : i32
    %c0_i32_0 = arith.constant 0 : i32
    %c0_i32_1 = arith.constant 0 : i32
    return %c0_i32, %c0_i32_0 : i32, i32
  }
  func.func @transform_4(%arg0: i32) -> (i32, i32) {
    %c0_i32 = arith.constant 0 : i32
    %c0_i32_0 = arith.constant 0 : i32
    %c0_i32_1 = arith.constant 0 : i32
    return %c0_i32, %c0_i32_0 : i32, i32
  }
  func.func @transform_5(%arg0: i32) -> (i32, i32) {
    %c0_i32 = arith.constant 0 : i32
    %c0_i32_0 = arith.constant 0 : i32
    %c0_i32_1 = arith.constant 0 : i32
    return %c0_i32, %c0_i32_0 : i32, i32
  }
  func.func @transform_6(%arg0: i32) -> (i32, i32) {
    %c0_i32 = arith.constant 0 : i32
    %c0_i32_0 = arith.constant 0 : i32
    %c0_i32_1 = arith.constant 0 : i32
    return %c0_i32, %c0_i32_0 : i32, i32
  }
  func.func @transform_7(%arg0: i32) -> (i32, i32) {
    %c0_i32 = arith.constant 0 : i32
    %c0_i32_0 = arith.constant 0 : i32
    %c0_i32_1 = arith.constant 0 : i32
    return %c0_i32, %c0_i32_0 : i32, i32
  }
  func.func @transform_8(%arg0: i32) -> (i32, i32) {
    %c0_i32 = arith.constant 0 : i32
    %c0_i32_0 = arith.constant 0 : i32
    return %c0_i32, %arg0 : i32, i32
  }
  func.func @transform_9(%arg0: i32) -> (i32, i32) {
    %c0_i32 = arith.constant 0 : i32
    %c0_i32_0 = arith.constant 0 : i32
    return %c0_i32, %arg0 : i32, i32
  }
  func.func @transform_10(%arg0: i32) -> (i32, i32) {
    %c0_i32 = arith.constant 0 : i32
    %c0_i32_0 = arith.constant 0 : i32
    return %c0_i32, %arg0 : i32, i32
  }
}

</mosaic_0001>

<llo_original>
// kernel: squeeze.3
$region0: #{squeeze.3}
  %s0 = inlined_call_operand.vmem [shape: s32[8], index: 0, kind: input, shape index: {}]
  %s1 = inlined_call_operand.hbm [shape: s32[2,4], index: 1, kind: output, shape index: {}]
  $region1: #{squeeze.3} parent=0
    #allocation0 [shape = 'u8[1024]{0}', space=vmem, size = 0x400, scoped, tag = 'operand span for operand 1']
    #allocation1 [shape = 's32[1]{0}', space=sflag, size = 0x4, scoped, tag = 'scoped memory for squeeze.3']
    #allocation2 [shape = 'u8[4096]{0}', space=vmem, size = 0x1000, scoped, tag = 'scoped mem for output reshape']
    #allocation3 [shape = 'u8[4096]{0}', space=vmem, size = 0x1000, scoped, tag = 'scoped mem for input reshape']
    %2 = vsyncpa [#allocation1], 0
    %s4 = ssub.s32 2, 1
    %v5 = vld [vmem:[%s0] sm:%s4]
    %6 = vst [vmem:[#allocation3] sm:%s4] %v5
    %v7 = vld [vmem:[#allocation3] sm:$0x1]
    %vm8 = vcmask 31744
    %9 = vst.msk [vmem:[#allocation2] sm:$0x1] %vm8, %v7
    %v10 = vld [vmem:[#allocation3] sm:$0x1]
    %11 = vrot.lane.b32.xlu0 %v10, 124
    %v12 = vpop.permute.xlu0 %11
    %vm13 = vcmask 31744
    %s14 = scalar_lea.vmem [#allocation2], 1
    %15 = vst.msk [vmem:[%s14] sm:$0x1] %vm13, %v12
    %s17 = ssub.s32 4, 1
    %v18 = vld [vmem:[#allocation2] sm:%s17]
    %s20 = ssub.s32 4, 1
    %21 = vst [vmem:[#allocation0] sm:%s20] %v18
    %23 = vsyncadd [#allocation1], 0
    %s25 = sshll.u32 [#allocation0], 4
    %s26 = int_to_ptr.vmem [resolvable:$true] %s25
    %s27 = sshll.u32 %s1, 4
    %s28 = int_to_ptr.hbm [resolvable:$true] %s27
    %30 = dma.vmem_to_hbm [thread:$0]  %s26, 32, %s28, [#allocation1]
    %32 = dma.done [#allocation1], 32
    %33 = vsyncpa [#allocation1], 1

// kernel: squeeze.4
$region0: #{squeeze.4}
  %s0 = inlined_call_operand.vmem [shape: f32[8], index: 0, kind: input, shape index: {}]
  %s1 = inlined_call_operand.hbm [shape: f32[2,4,1], index: 1, kind: output, shape index: {}]
  $region1: #{squeeze.4} parent=0
    #allocation0 [shape = 'u8[1024]{0}', space=vmem, size = 0x400, scoped, tag = 'operand span for operand 1']
    #allocation1 [shape = 's32[1]{0}', space=sflag, size = 0x4, scoped, tag = 'scoped memory for squeeze.4']
    #allocation2 [shape = 'u8[4096]{0}', space=vmem, size = 0x1000, scoped, tag = 'scoped mem for output reshape']
    #allocation3 [shape = 'u8[4096]{0}', space=vmem, size = 0x1000, scoped, tag = 'scoped mem for input reshape']
    %2 = vsyncpa [#allocation1], 0
    %s4 = ssub.s32 2, 1
    %v5 = vld [vmem:[%s0] sm:%s4]
    %6 = vst [vmem:[#allocation3] sm:%s4] %v5
    %v7 = vld [vmem:[#allocation3] sm:$0x1]
    %vm8 = vcmask 31744
    %9 = vst.msk [vmem:[#allocation2] sm:$0x1] %vm8, %v7
    %v10 = vld [vmem:[#allocation3] sm:$0x1]
    %11 = vrot.lane.b32.xlu0 %v10, 124
    %v12 = vpop.permute.xlu0 %11
    %vm13 = vcmask 31744
    %s14 = scalar_lea.vmem [#allocation2], 1
    %15 = vst.msk [vmem:[%s14] sm:$0x1] %vm13, %v12
    %s17 = ssub.s32 4, 1
    %v18 = vld [vmem:[#allocation2] sm:%s17]
    %s20 = ssub.s32 4, 1
    %21 = vst [vmem:[#allocation0] sm:%s20] %v18
    %23 = vsyncadd [#allocation1], 0
    %s25 = sshll.u32 [#allocation0], 4
    %s26 = int_to_ptr.vmem [resolvable:$true] %s25
    %s27 = sshll.u32 %s1, 4
    %s28 = int_to_ptr.hbm [resolvable:$true] %s27
    %30 = dma.vmem_to_hbm [thread:$0]  %s26, 32, %s28, [#allocation1]
    %32 = dma.done [#allocation1], 32
    %33 = vsyncpa [#allocation1], 1

// kernel: squeeze.5
$region0: #{squeeze.5}
  %s0 = inlined_call_operand.vmem [shape: f32[8], index: 0, kind: input, shape index: {}]
  %s1 = inlined_call_operand.hbm [shape: f32[2,4], index: 1, kind: output, shape index: {}]
  $region1: #{squeeze.5} parent=0
    #allocation0 [shape = 'u8[1024]{0}', space=vmem, size = 0x400, scoped, tag = 'operand span for operand 1']
    #allocation1 [shape = 's32[1]{0}', space=sflag, size = 0x4, scoped, tag = 'scoped memory for squeeze.5']
    #allocation2 [shape = 'u8[4096]{0}', space=vmem, size = 0x1000, scoped, tag = 'scoped mem for output reshape']
    #allocation3 [shape = 'u8[4096]{0}', space=vmem, size = 0x1000, scoped, tag = 'scoped mem for input reshape']
    %2 = vsyncpa [#allocation1], 0
    %s4 = ssub.s32 2, 1
    %v5 = vld [vmem:[%s0] sm:%s4]
    %6 = vst [vmem:[#allocation3] sm:%s4] %v5
    %v7 = vld [vmem:[#allocation3] sm:$0x1]
    %vm8 = vcmask 31744
    %9 = vst.msk [vmem:[#allocation2] sm:$0x1] %vm8, %v7
    %v10 = vld [vmem:[#allocation3] sm:$0x1]
    %11 = vrot.lane.b32.xlu0 %v10, 124
    %v12 = vpop.permute.xlu0 %11
    %vm13 = vcmask 31744
    %s14 = scalar_lea.vmem [#allocation2], 1
    %15 = vst.msk [vmem:[%s14] sm:$0x1] %vm13, %v12
    %s17 = ssub.s32 4, 1
    %v18 = vld [vmem:[#allocation2] sm:%s17]
    %s20 = ssub.s32 4, 1
    %21 = vst [vmem:[#allocation0] sm:%s20] %v18
    %23 = vsyncadd [#allocation1], 0
    %s25 = sshll.u32 [#allocation0], 4
    %s26 = int_to_ptr.vmem [resolvable:$true] %s25
    %s27 = sshll.u32 %s1, 4
    %s28 = int_to_ptr.hbm [resolvable:$true] %s27
    %30 = dma.vmem_to_hbm [thread:$0]  %s26, 32, %s28, [#allocation1]
    %32 = dma.done [#allocation1], 32
    %33 = vsyncpa [#allocation1], 1

// kernel: fnn_policy_forward.1
$region0: #{fnn_policy_forward.1}
  #allocation0 [shape = 'u32[]', space=smem, size = 0x4, offset = 0x4, fixed_abs, tag = 'smem constant byte address 0x4 - core index']
  #allocation1 [shape = 'u32[72,128]{1,0:T(1,128)}', space=vmem, size = 0x9000, scoped, tag = 'internal scratch']
  %s0 = inlined_call_operand.vmem [shape: bf16[128,128], index: 0, kind: input, shape index: {}]
  %s1 = inlined_call_operand.vmem [shape: f32[4,128], index: 1, kind: input, shape index: {}]
  %s2 = inlined_call_operand.vmem [shape: bf16[128,128], index: 2, kind: input, shape index: {}]
  %s3 = inlined_call_operand.vmem [shape: f32[128,1], index: 3, kind: input, shape index: {}]
  %s4 = inlined_call_operand.vmem [shape: bf16[128,128], index: 4, kind: input, shape index: {}]
  %s5 = inlined_call_operand.vmem [shape: f32[128,1], index: 5, kind: input, shape index: {}]
  %s6 = inlined_call_operand.vmem [shape: bf16[8,128], index: 6, kind: input, shape index: {}]
  %s7 = inlined_call_operand.vmem [shape: f32[8,1], index: 7, kind: input, shape index: {}]
  %s8 = inlined_call_operand.vmem [shape: s32[1,128], index: 8, kind: output, shape index: {0}]
  %s9 = inlined_call_operand.vmem [shape: f32[1,128], index: 9, kind: output, shape index: {1}]
  %s10 = inlined_call_operand.vmem [shape: f32[1,128], index: 10, kind: output, shape index: {2}]
  %11 = xla_tuple %s8, %s9, %s10
  %s12 = sld [smem:[#allocation0]]
  $region58: #{fnn_policy_forward.1} parent=0
    _
  %s14 = ssub.s32 1, %s12
  %s15 = scalar_select 0, %s14, %s12
  // Predicated region
  $region2: #{fnn_policy_forward.1} parent=0 // pred_check
    _
  $region3: #{fnn_policy_forward.1} parent=0 // pred_check_branch
    %17 = sbr.rel (0) target = $region5
  $region4: #{fnn_policy_forward.1} parent=0 // pred_region
    _
  $region5: #{fnn_policy_forward.1} parent=0 // pred_fallthru
    _
  // Predicated region
  $region6: #{fnn_policy_forward.1} parent=0 // pred_check
    _
  $region7: #{fnn_policy_forward.1} parent=0 // pred_check_branch
    %19 = sbr.rel (0) target = $region9
  $region8: #{fnn_policy_forward.1} parent=0 // pred_region
    _
  $region9: #{fnn_policy_forward.1} parent=0 // pred_fallthru
    _
  // Predicated region
  $region10: #{fnn_policy_forward.1} parent=0 // pred_check
    _
  $region11: #{fnn_policy_forward.1} parent=0 // pred_check_branch
    %21 = sbr.rel (0) target = $region13
  $region12: #{fnn_policy_forward.1} parent=0 // pred_region
    _
  $region13: #{fnn_policy_forward.1} parent=0 // pred_fallthru
    _
  // Predicated region
  $region14: #{fnn_policy_forward.1} parent=0 // pred_check
    _
  $region15: #{fnn_policy_forward.1} parent=0 // pred_check_branch
    %23 = sbr.rel (0) target = $region17
  $region16: #{fnn_policy_forward.1} parent=0 // pred_region
    _
  $region17: #{fnn_policy_forward.1} parent=0 // pred_fallthru
    _
  // Predicated region
  $region18: #{fnn_policy_forward.1} parent=0 // pred_check
    _
  $region19: #{fnn_policy_forward.1} parent=0 // pred_check_branch
    %25 = sbr.rel (0) target = $region21
  $region20: #{fnn_policy_forward.1} parent=0 // pred_region
    _
  $region21: #{fnn_policy_forward.1} parent=0 // pred_fallthru
    _
  // Predicated region
  $region22: #{fnn_policy_forward.1} parent=0 // pred_check
    _
  $region23: #{fnn_policy_forward.1} parent=0 // pred_check_branch
    %27 = sbr.rel (0) target = $region25
  $region24: #{fnn_policy_forward.1} parent=0 // pred_region
    _
  $region25: #{fnn_policy_forward.1} parent=0 // pred_fallthru
    _
  // Predicated region
  $region26: #{fnn_policy_forward.1} parent=0 // pred_check
    _
  $region27: #{fnn_policy_forward.1} parent=0 // pred_check_branch
    %29 = sbr.rel (0) target = $region29
  $region28: #{fnn_policy_forward.1} parent=0 // pred_region
    _
  $region29: #{fnn_policy_forward.1} parent=0 // pred_fallthru
    _
  // Predicated region
  $region30: #{fnn_policy_forward.1} parent=0 // pred_check
    _
  $region31: #{fnn_policy_forward.1} parent=0 // pred_check_branch
    %31 = sbr.rel (0) target = $region33
  $region32: #{fnn_policy_forward.1} parent=0 // pred_region
    _
  $region33: #{fnn_policy_forward.1} parent=0 // pred_fallthru
    _
  %v32 = vld [vmem:[%s0] sm:$0xf]
  %v33 = vld [vmem:[%s0 + $0x4] sm:$0xf]
  %v34 = vld [vmem:[%s0 + $0x8] sm:$0xf]
  %v35 = vld [vmem:[%s0 + $0xc] sm:$0xf]
  %v36 = vld [vmem:[%s0 + $0x10] sm:$0xf]
  %v37 = vld [vmem:[%s0 + $0x14] sm:$0xf]
  %v38 = vld [vmem:[%s0 + $0x18] sm:$0xf]
  %v39 = vld [vmem:[%s0 + $0x1c] sm:$0xf]
  %v40 = vld [vmem:[%s0 + $0x20] sm:$0xf]
  %v41 = vld [vmem:[%s0 + $0x24] sm:$0xf]
  %v42 = vld [vmem:[%s0 + $0x28] sm:$0xf]
  %v43 = vld [vmem:[%s0 + $0x2c] sm:$0xf]
  %v44 = vld [vmem:[%s0 + $0x30] sm:$0xf]
  %v45 = vld [vmem:[%s0 + $0x34] sm:$0xf]
  %v46 = vld [vmem:[%s0 + $0x38] sm:$0xf]
  %v47 = vld [vmem:[%s0 + $0x3c] sm:$0xf]
  %v48 = vld [vmem:[%s2] sm:$0xf]
  %v49 = vld [vmem:[%s2 + $0x4] sm:$0xf]
  %v50 = vld [vmem:[%s2 + $0x8] sm:$0xf]
  %v51 = vld [vmem:[%s2 + $0xc] sm:$0xf]
  %v52 = vld [vmem:[%s2 + $0x10] sm:$0xf]
  %v53 = vld [vmem:[%s2 + $0x14] sm:$0xf]
  %v54 = vld [vmem:[%s2 + $0x18] sm:$0xf]
  %v55 = vld [vmem:[%s2 + $0x1c] sm:$0xf]
  %v56 = vld [vmem:[%s2 + $0x20] sm:$0xf]
  %v57 = vld [vmem:[%s2 + $0x24] sm:$0xf]
  %v58 = vld [vmem:[%s2 + $0x28] sm:$0xf]
  %v59 = vld [vmem:[%s2 + $0x2c] sm:$0xf]
  %v60 = vld [vmem:[%s2 + $0x30] sm:$0xf]
  %v61 = vld [vmem:[%s2 + $0x34] sm:$0xf]
  %v62 = vld [vmem:[%s2 + $0x38] sm:$0xf]
  %v63 = vld [vmem:[%s2 + $0x3c] sm:$0xf]
  %v64 = vld [vmem:[%s3] sm:$0xff]
  %v65 = vld [vmem:[%s3 + $0x8] sm:$0xff]
  %v66 = vld [vmem:[%s3 + $0x10] sm:$0xff]
  %v67 = vld [vmem:[%s3 + $0x18] sm:$0xff]
  %v68 = vld [vmem:[%s3 + $0x20] sm:$0xff]
  %v69 = vld [vmem:[%s3 + $0x28] sm:$0xff]
  %v70 = vld [vmem:[%s3 + $0x30] sm:$0xff]
  %v71 = vld [vmem:[%s3 + $0x38] sm:$0xff]
  %v72 = vld [vmem:[%s3 + $0x40] sm:$0xff]
  %v73 = vld [vmem:[%s3 + $0x48] sm:$0xff]
  %v74 = vld [vmem:[%s3 + $0x50] sm:$0xff]
  %v75 = vld [vmem:[%s3 + $0x58] sm:$0xff]
  %v76 = vld [vmem:[%s3 + $0x60] sm:$0xff]
  %v77 = vld [vmem:[%s3 + $0x68] sm:$0xff]
  %v78 = vld [vmem:[%s3 + $0x70] sm:$0xff]
  %v79 = vld [vmem:[%s3 + $0x78] sm:$0xff]
  %81 = vset.pattern.permute.xlu0 0
  %82 = vperm.xlu0 %81, %v64
  %v83 = vpop.permute.xlu0 %82
  %86 = vset.pattern.permute.xlu0 0
  %87 = vperm.xlu0 %86, %v65
  %v88 = vpop.permute.xlu0 %87
  %91 = vset.pattern.permute.xlu0 0
  %92 = vperm.xlu0 %91, %v66
  %v93 = vpop.permute.xlu0 %92
  %96 = vset.pattern.permute.xlu0 0
  %97 = vperm.xlu0 %96, %v67
  %v98 = vpop.permute.xlu0 %97
  %101 = vset.pattern.permute.xlu0 0
  %102 = vperm.xlu0 %101, %v68
  %v103 = vpop.permute.xlu0 %102
  %106 = vset.pattern.permute.xlu0 0
  %107 = vperm.xlu0 %106, %v69
  %v108 = vpop.permute.xlu0 %107
  %111 = vset.pattern.permute.xlu0 0
  %112 = vperm.xlu0 %111, %v70
  %v113 = vpop.permute.xlu0 %112
  %116 = vset.pattern.permute.xlu0 0
  %117 = vperm.xlu0 %116, %v71
  %v118 = vpop.permute.xlu0 %117
  %121 = vset.pattern.permute.xlu0 0
  %122 = vperm.xlu0 %121, %v72
  %v123 = vpop.permute.xlu0 %122
  %126 = vset.pattern.permute.xlu0 0
  %127 = vperm.xlu0 %126, %v73
  %v128 = vpop.permute.xlu0 %127
  %131 = vset.pattern.permute.xlu0 0
  %132 = vperm.xlu0 %131, %v74
  %v133 = vpop.permute.xlu0 %132
  %136 = vset.pattern.permute.xlu0 0
  %137 = vperm.xlu0 %136, %v75
  %v138 = vpop.permute.xlu0 %137
  %141 = vset.pattern.permute.xlu0 0
  %142 = vperm.xlu0 %141, %v76
  %v143 = vpop.permute.xlu0 %142
  %146 = vset.pattern.permute.xlu0 0
  %147 = vperm.xlu0 %146, %v77
  %v148 = vpop.permute.xlu0 %147
  %151 = vset.pattern.permute.xlu0 0
  %152 = vperm.xlu0 %151, %v78
  %v153 = vpop.permute.xlu0 %152
  %156 = vset.pattern.permute.xlu0 0
  %157 = vperm.xlu0 %156, %v79
  %v158 = vpop.permute.xlu0 %157
  %v176 = vunpack.c.l.b16 %v48
  %v177 = vunpack.c.l.b16 %v49
  %v178 = vunpack.c.l.b16 %v50
  %v179 = vunpack.c.l.b16 %v51
  %v180 = vunpack.c.l.b16 %v52
  %v181 = vunpack.c.l.b16 %v53
  %v182 = vunpack.c.l.b16 %v54
  %v183 = vunpack.c.l.b16 %v55
  %v184 = vunpack.c.l.b16 %v56
  %v185 = vunpack.c.l.b16 %v57
  %v186 = vunpack.c.l.b16 %v58
  %v187 = vunpack.c.l.b16 %v59
  %v188 = vunpack.c.l.b16 %v60
  %v189 = vunpack.c.l.b16 %v61
  %v190 = vunpack.c.l.b16 %v62
  %v191 = vunpack.c.l.b16 %v63
  %v192 = vpack.c.b16 %v177, %v176
  %v193 = vpack.c.b16 %v179, %v178
  %v194 = vpack.c.b16 %v181, %v180
  %v195 = vpack.c.b16 %v183, %v182
  %v196 = vpack.c.b16 %v185, %v184
  %v197 = vpack.c.b16 %v187, %v186
  %v198 = vpack.c.b16 %v189, %v188
  %v199 = vpack.c.b16 %v191, %v190
  %v224 = vunpack.c.l.b16 %v32
  %v225 = vunpack.c.l.b16 %v33
  %v226 = vunpack.c.l.b16 %v34
  %v227 = vunpack.c.l.b16 %v35
  %v228 = vunpack.c.l.b16 %v36
  %v229 = vunpack.c.l.b16 %v37
  %v230 = vunpack.c.l.b16 %v38
  %v231 = vunpack.c.l.b16 %v39
  %v232 = vunpack.c.l.b16 %v40
  %v233 = vunpack.c.l.b16 %v41
  %v234 = vunpack.c.l.b16 %v42
  %v235 = vunpack.c.l.b16 %v43
  %v236 = vunpack.c.l.b16 %v44
  %v237 = vunpack.c.l.b16 %v45
  %v238 = vunpack.c.l.b16 %v46
  %v239 = vunpack.c.l.b16 %v47
  %v240 = vpack.c.b16 %v225, %v224
  %v241 = vpack.c.b16 %v227, %v226
  %v242 = vpack.c.b16 %v229, %v228
  %v243 = vpack.c.b16 %v231, %v230
  %v244 = vpack.c.b16 %v233, %v232
  %v245 = vpack.c.b16 %v235, %v234
  %v246 = vpack.c.b16 %v237, %v236
  %v247 = vpack.c.b16 %v239, %v238
  %256 = vmatpush.bf16.msra.mxu0 %v247
  %257 = vmatpush.bf16.msra.mxu0 %v246
  %258 = vmatpush.bf16.msra.mxu0 %v245
  %259 = vmatpush.bf16.msra.mxu0 %v244
  %260 = vmatpush.bf16.msra.mxu0 %v243
  %261 = vmatpush.bf16.msra.mxu0 %v242
  %262 = vmatpush.bf16.msra.mxu0 %v241
  %263 = vmatpush.bf16.msra.mxu0 %v240
  %264 = vmatmul.bf16.gmra.mxu0 %v192
  %v265 = vpop.f32.mrf.mxu0
  %v266 = vadd.f32 %v83, %v265
  %v267 = vpop.f32.mrf.mxu0
  %v268 = vadd.f32 %v88, %v267
  %269 = vmatmul.bf16.gmra.mxu0 %v193
  %v270 = vpop.f32.mrf.mxu0
  %v271 = vadd.f32 %v93, %v270
  %v272 = vpop.f32.mrf.mxu0
  %v273 = vadd.f32 %v98, %v272
  %274 = vmatmul.bf16.gmra.mxu0 %v194
  %v275 = vpop.f32.mrf.mxu0
  %v276 = vadd.f32 %v103, %v275
  %v277 = vpop.f32.mrf.mxu0
  %v278 = vadd.f32 %v108, %v277
  %279 = vmatmul.bf16.gmra.mxu0 %v195
  %v280 = vpop.f32.mrf.mxu0
  %v281 = vadd.f32 %v113, %v280
  %v282 = vpop.f32.mrf.mxu0
  %v283 = vadd.f32 %v118, %v282
  %284 = vmatmul.bf16.gmra.mxu0 %v196
  %v285 = vpop.f32.mrf.mxu0
  %v286 = vadd.f32 %v123, %v285
  %v287 = vpop.f32.mrf.mxu0
  %v288 = vadd.f32 %v128, %v287
  %289 = vmatmul.bf16.gmra.mxu0 %v197
  %v290 = vpop.f32.mrf.mxu0
  %v291 = vadd.f32 %v133, %v290
  %v292 = vpop.f32.mrf.mxu0
  %v293 = vadd.f32 %v138, %v292
  %294 = vmatmul.bf16.gmra.mxu0 %v198
  %v295 = vpop.f32.mrf.mxu0
  %v296 = vadd.f32 %v143, %v295
  %v297 = vpop.f32.mrf.mxu0
  %v298 = vadd.f32 %v148, %v297
  %299 = vmatmul.bf16.gmra.mxu0 %v199
  %v300 = vpop.f32.mrf.mxu0
  %v301 = vadd.f32 %v153, %v300
  %v302 = vpop.f32.mrf.mxu0
  %v303 = vadd.f32 %v158, %v302
  %304 = vdwg.mxu0
  %v305 = vmax.f32 %v266, 0.0
  %v306 = vmax.f32 %v268, 0.0
  %v307 = vmax.f32 %v271, 0.0
  %v308 = vmax.f32 %v273, 0.0
  %v309 = vmax.f32 %v276, 0.0
  %v310 = vmax.f32 %v278, 0.0
  %v311 = vmax.f32 %v281, 0.0
  %v312 = vmax.f32 %v283, 0.0
  %v313 = vmax.f32 %v286, 0.0
  %v314 = vmax.f32 %v288, 0.0
  %v315 = vmax.f32 %v291, 0.0
  %v316 = vmax.f32 %v293, 0.0
  %v317 = vmax.f32 %v296, 0.0
  %v318 = vmax.f32 %v298, 0.0
  %v319 = vmax.f32 %v301, 0.0
  %v320 = vmax.f32 %v303, 0.0
  %v321 = vld [vmem:[%s4] sm:$0xf]
  %v322 = vld [vmem:[%s4 + $0x4] sm:$0xf]
  %v323 = vld [vmem:[%s4 + $0x8] sm:$0xf]
  %v324 = vld [vmem:[%s4 + $0xc] sm:$0xf]
  %v325 = vld [vmem:[%s4 + $0x10] sm:$0xf]
  %v326 = vld [vmem:[%s4 + $0x14] sm:$0xf]
  %v327 = vld [vmem:[%s4 + $0x18] sm:$0xf]
  %v328 = vld [vmem:[%s4 + $0x1c] sm:$0xf]
  %v329 = vld [vmem:[%s4 + $0x20] sm:$0xf]
  %v330 = vld [vmem:[%s4 + $0x24] sm:$0xf]
  %v331 = vld [vmem:[%s4 + $0x28] sm:$0xf]
  %v332 = vld [vmem:[%s4 + $0x2c] sm:$0xf]
  %v333 = vld [vmem:[%s4 + $0x30] sm:$0xf]
  %v334 = vld [vmem:[%s4 + $0x34] sm:$0xf]
  %v335 = vld [vmem:[%s4 + $0x38] sm:$0xf]
  %v336 = vld [vmem:[%s4 + $0x3c] sm:$0xf]
  %v337 = vpack.c.bf16 %v306, %v305
  %v338 = vpack.c.bf16 %v308, %v307
  %v339 = vpack.c.bf16 %v310, %v309
  %v340 = vpack.c.bf16 %v312, %v311
  %v341 = vpack.c.bf16 %v314, %v313
  %v342 = vpack.c.bf16 %v316, %v315
  %v343 = vpack.c.bf16 %v318, %v317
  %v344 = vpack.c.bf16 %v320, %v319
  %v345 = vld [vmem:[%s5] sm:$0xff]
  %v346 = vld [vmem:[%s5 + $0x8] sm:$0xff]
  %v347 = vld [vmem:[%s5 + $0x10] sm:$0xff]
  %v348 = vld [vmem:[%s5 + $0x18] sm:$0xff]
  %v349 = vld [vmem:[%s5 + $0x20] sm:$0xff]
  %v350 = vld [vmem:[%s5 + $0x28] sm:$0xff]
  %v351 = vld [vmem:[%s5 + $0x30] sm:$0xff]
  %v352 = vld [vmem:[%s5 + $0x38] sm:$0xff]
  %v353 = vld [vmem:[%s5 + $0x40] sm:$0xff]
  %v354 = vld [vmem:[%s5 + $0x48] sm:$0xff]
  %v355 = vld [vmem:[%s5 + $0x50] sm:$0xff]
  %v356 = vld [vmem:[%s5 + $0x58] sm:$0xff]
  %v357 = vld [vmem:[%s5 + $0x60] sm:$0xff]
  %v358 = vld [vmem:[%s5 + $0x68] sm:$0xff]
  %v359 = vld [vmem:[%s5 + $0x70] sm:$0xff]
  %v360 = vld [vmem:[%s5 + $0x78] sm:$0xff]
  %362 = vset.pattern.permute.xlu0 0
  %363 = vperm.xlu0 %362, %v345
  %v364 = vpop.permute.xlu0 %363
  %367 = vset.pattern.permute.xlu0 0
  %368 = vperm.xlu0 %367, %v346
  %v369 = vpop.permute.xlu0 %368
  %372 = vset.pattern.permute.xlu0 0
  %373 = vperm.xlu0 %372, %v347
  %v374 = vpop.permute.xlu0 %373
  %377 = vset.pattern.permute.xlu0 0
  %378 = vperm.xlu0 %377, %v348
  %v379 = vpop.permute.xlu0 %378
  %382 = vset.pattern.permute.xlu0 0
  %383 = vperm.xlu0 %382, %v349
  %v384 = vpop.permute.xlu0 %383
  %387 = vset.pattern.permute.xlu0 0
  %388 = vperm.xlu0 %387, %v350
  %v389 = vpop.permute.xlu0 %388
  %392 = vset.pattern.permute.xlu0 0
  %393 = vperm.xlu0 %392, %v351
  %v394 = vpop.permute.xlu0 %393
  %397 = vset.pattern.permute.xlu0 0
  %398 = vperm.xlu0 %397, %v352
  %v399 = vpop.permute.xlu0 %398
  %402 = vset.pattern.permute.xlu0 0
  %403 = vperm.xlu0 %402, %v353
  %v404 = vpop.permute.xlu0 %403
  %407 = vset.pattern.permute.xlu0 0
  %408 = vperm.xlu0 %407, %v354
  %v409 = vpop.permute.xlu0 %408
  %412 = vset.pattern.permute.xlu0 0
  %413 = vperm.xlu0 %412, %v355
  %v414 = vpop.permute.xlu0 %413
  %417 = vset.pattern.permute.xlu0 0
  %418 = vperm.xlu0 %417, %v356
  %v419 = vpop.permute.xlu0 %418
  %422 = vset.pattern.permute.xlu0 0
  %423 = vperm.xlu0 %422, %v357
  %v424 = vpop.permute.xlu0 %423
  %427 = vset.pattern.permute.xlu0 0
  %428 = vperm.xlu0 %427, %v358
  %v429 = vpop.permute.xlu0 %428
  %432 = vset.pattern.permute.xlu0 0
  %433 = vperm.xlu0 %432, %v359
  %v434 = vpop.permute.xlu0 %433
  %437 = vset.pattern.permute.xlu0 0
  %438 = vperm.xlu0 %437, %v360
  %v439 = vpop.permute.xlu0 %438
  %v457 = vunpack.c.l.b16 %v321
  %v458 = vunpack.c.l.b16 %v322
  %v459 = vunpack.c.l.b16 %v323
  %v460 = vunpack.c.l.b16 %v324
  %v461 = vunpack.c.l.b16 %v325
  %v462 = vunpack.c.l.b16 %v326
  %v463 = vunpack.c.l.b16 %v327
  %v464 = vunpack.c.l.b16 %v328
  %v465 = vunpack.c.l.b16 %v329
  %v466 = vunpack.c.l.b16 %v330
  %v467 = vunpack.c.l.b16 %v331
  %v468 = vunpack.c.l.b16 %v332
  %v469 = vunpack.c.l.b16 %v333
  %v470 = vunpack.c.l.b16 %v334
  %v471 = vunpack.c.l.b16 %v335
  %v472 = vunpack.c.l.b16 %v336
  %v473 = vpack.c.b16 %v458, %v457
  %v474 = vpack.c.b16 %v460, %v459
  %v475 = vpack.c.b16 %v462, %v461
  %v476 = vpack.c.b16 %v464, %v463
  %v477 = vpack.c.b16 %v466, %v465
  %v478 = vpack.c.b16 %v468, %v467
  %v479 = vpack.c.b16 %v470, %v469
  %v480 = vpack.c.b16 %v472, %v471
  %489 = vmatpush.bf16.msra.mxu0 %v344
  %490 = vmatpush.bf16.msra.mxu0 %v343
  %491 = vmatpush.bf16.msra.mxu0 %v342
  %492 = vmatpush.bf16.msra.mxu0 %v341
  %493 = vmatpush.bf16.msra.mxu0 %v340
  %494 = vmatpush.bf16.msra.mxu0 %v339
  %495 = vmatpush.bf16.msra.mxu0 %v338
  %496 = vmatpush.bf16.msra.mxu0 %v337
  %497 = vmatmul.bf16.gmra.mxu0 %v473
  %v498 = vpop.f32.mrf.mxu0
  %v499 = vadd.f32 %v364, %v498
  %v500 = vpop.f32.mrf.mxu0
  %v501 = vadd.f32 %v369, %v500
  %502 = vmatmul.bf16.gmra.mxu0 %v474
  %v503 = vpop.f32.mrf.mxu0
  %v504 = vadd.f32 %v374, %v503
  %v505 = vpop.f32.mrf.mxu0
  %v506 = vadd.f32 %v379, %v505
  %507 = vmatmul.bf16.gmra.mxu0 %v475
  %v508 = vpop.f32.mrf.mxu0
  %v509 = vadd.f32 %v384, %v508
  %v510 = vpop.f32.mrf.mxu0
  %v511 = vadd.f32 %v389, %v510
  %512 = vmatmul.bf16.gmra.mxu0 %v476
  %v513 = vpop.f32.mrf.mxu0
  %v514 = vadd.f32 %v394, %v513
  %v515 = vpop.f32.mrf.mxu0
  %v516 = vadd.f32 %v399, %v515
  %517 = vmatmul.bf16.gmra.mxu0 %v477
  %v518 = vpop.f32.mrf.mxu0
  %v519 = vadd.f32 %v404, %v518
  %v520 = vpop.f32.mrf.mxu0
  %v521 = vadd.f32 %v409, %v520
  %522 = vmatmul.bf16.gmra.mxu0 %v478
  %v523 = vpop.f32.mrf.mxu0
  %v524 = vadd.f32 %v414, %v523
  %v525 = vpop.f32.mrf.mxu0
  %v526 = vadd.f32 %v419, %v525
  %527 = vmatmul.bf16.gmra.mxu0 %v479
  %v528 = vpop.f32.mrf.mxu0
  %v529 = vadd.f32 %v424, %v528
  %v530 = vpop.f32.mrf.mxu0
  %v531 = vadd.f32 %v429, %v530
  %532 = vmatmul.bf16.gmra.mxu0 %v480
  %v533 = vpop.f32.mrf.mxu0
  %v534 = vadd.f32 %v434, %v533
  %v535 = vpop.f32.mrf.mxu0
  %v536 = vadd.f32 %v439, %v535
  %537 = vdwg.mxu0
  %v538 = vmax.f32 %v499, 0.0
  %v539 = vmax.f32 %v501, 0.0
  %v540 = vmax.f32 %v504, 0.0
  %v541 = vmax.f32 %v506, 0.0
  %v542 = vmax.f32 %v509, 0.0
  %v543 = vmax.f32 %v511, 0.0
  %v544 = vmax.f32 %v514, 0.0
  %v545 = vmax.f32 %v516, 0.0
  %v546 = vmax.f32 %v519, 0.0
  %v547 = vmax.f32 %v521, 0.0
  %v548 = vmax.f32 %v524, 0.0
  %v549 = vmax.f32 %v526, 0.0
  %v550 = vmax.f32 %v529, 0.0
  %v551 = vmax.f32 %v531, 0.0
  %v552 = vmax.f32 %v534, 0.0
  %v553 = vmax.f32 %v536, 0.0
  %v554 = vld [vmem:[%s6] sm:$0xf]
  %v555 = vpack.c.bf16 %v539, %v538
  %v556 = vpack.c.bf16 %v541, %v540
  %v557 = vpack.c.bf16 %v543, %v542
  %v558 = vpack.c.bf16 %v545, %v544
  %v559 = vpack.c.bf16 %v547, %v546
  %v560 = vpack.c.bf16 %v549, %v548
  %v561 = vpack.c.bf16 %v551, %v550
  %v562 = vpack.c.bf16 %v553, %v552
  %v563 = vld [vmem:[%s7] sm:$0xff]
  %565 = vset.pattern.permute.xlu0 0
  %566 = vperm.xlu0 %565, %v563
  %v567 = vpop.permute.xlu0 %566
  %569 = vmatpush.bf16.msra.mxu0 %v562
  %570 = vmatpush.bf16.msra.mxu0 %v561
  %571 = vmatpush.bf16.msra.mxu0 %v560
  %572 = vmatpush.bf16.msra.mxu0 %v559
  %573 = vmatpush.bf16.msra.mxu0 %v558
  %574 = vmatpush.bf16.msra.mxu0 %v557
  %575 = vmatpush.bf16.msra.mxu0 %v556
  %576 = vmatpush.bf16.msra.mxu0 %v555
  %577 = vmatmul.bf16.gmra.mxu0 %v554
  %v578 = vpop.f32.mrf.mxu0
  %v579 = vadd.f32 %v567, %v578
  %v580 = vpop.f32.mrf.mxu0
  %581 = vdwg.mxu0
  %v582 = vld [vmem:[%s1] sm:$0xf]
  %v583 = vadd.f32 %v579, %v582
  %v584 = vlaneseq
  %v585 = vshrl.u32 %v584, 7
  %v586 = vcvt.s32.f32 %v585
  %vm587 = vcmask 1043456
  %v588 = vsel %vm587, %v583, -inf
  %v589 = vrot.slane %v588, 4
  %v590 = vmax.f32 %v588, %v589
  %v591 = vrot.slane %v590, 2
  %v592 = vmax.f32 %v590, %v591
  %v593 = vrot.slane %v592, 1
  %v594 = vmax.f32 %v592, %v593
  %vm595 = vcmp.ge.f32.partialorder %v583, %v594
  %v596 = vsel %vm595, %v586, 4.0
  %v597 = vsel %vm587, %v596, inf
  %v598 = vrot.slane %v597, 4
  %v599 = vmin.f32 %v597, %v598
  %v600 = vrot.slane %v599, 2
  %v601 = vmin.f32 %v599, %v600
  %v602 = vrot.slane %v601, 1
  %v603 = vmin.f32 %v601, %v602
  %v604 = vsel %vm587, %v579, -inf
  %v605 = vrot.slane %v604, 4
  %v606 = vmax.f32 %v604, %v605
  %v607 = vrot.slane %v606, 2
  %v608 = vmax.f32 %v606, %v607
  %v609 = vrot.slane %v608, 1
  %v610 = vmax.f32 %v608, %v609
  %v611 = vsub.f32 %v579, %v610
  %v612 = vmul.f32 %v611, 1.442695
  %v613 = vpow.pop %v612
  %v614 = vsel %vm587, %v613, 0.0
  %v615 = vrot.slane %v614, 4
  %v616 = vadd.f32 %v614, %v615
  %v617 = vrot.slane %v616, 2
  %v618 = vadd.f32 %v616, %v617
  %v619 = vrot.slane %v618, 1
  %v620 = vadd.f32 %v618, %v619
  %v621 = vlog2.pop %v620
  %v622 = vmul.f32 %v621, 0.6931472
  %v623 = vadd.f32 %v622, %v610
  %vm624 = vcmp.eq.f32.partialorder %v586, %v603
  %v625 = vsel %vm624, %v579, 0.0
  %v626 = vsel %vm587, %v625, 0.0
  %v627 = vrot.slane %v626, 4
  %v628 = vadd.f32 %v626, %v627
  %v629 = vrot.slane %v628, 2
  %v630 = vadd.f32 %v628, %v629
  %v631 = vrot.slane %v630, 1
  %v632 = vadd.f32 %v630, %v631
  %v633 = vsub.f32 %v632, %v623
  %v634 = vcvt.f32.s32.to.zero.pseudo %v603
  %635 = vst [vmem:[%s8] sm:$0x1] %v634
  %636 = vst [vmem:[%s9 - $0x4] sm:$0x10] %v579
  %637 = vst [vmem:[%s10] sm:$0x1] %v633
  // Predicated region
  $region34: #{fnn_policy_forward.1} parent=0 // pred_check
    _
  $region35: #{fnn_policy_forward.1} parent=0 // pred_check_branch
    %639 = sbr.rel (0) target = $region37
  $region36: #{fnn_policy_forward.1} parent=0 // pred_region
    _
  $region37: #{fnn_policy_forward.1} parent=0 // pred_fallthru
    _
  // Predicated region
  $region38: #{fnn_policy_forward.1} parent=0 // pred_check
    _
  $region39: #{fnn_policy_forward.1} parent=0 // pred_check_branch
    %641 = sbr.rel (0) target = $region41
  $region40: #{fnn_policy_forward.1} parent=0 // pred_region
    _
  $region41: #{fnn_policy_forward.1} parent=0 // pred_fallthru
    _
  // Predicated region
  $region42: #{fnn_policy_forward.1} parent=0 // pred_check
    _
  $region43: #{fnn_policy_forward.1} parent=0 // pred_check_branch
    %643 = sbr.rel (0) target = $region45
  $region44: #{fnn_policy_forward.1} parent=0 // pred_region
    _
  $region45: #{fnn_policy_forward.1} parent=0 // pred_fallthru
    _
  // Predicated region
  $region46: #{fnn_policy_forward.1} parent=0 // pred_check
    _
  $region47: #{fnn_policy_forward.1} parent=0 // pred_check_branch
    %645 = sbr.rel (0) target = $region49
  $region48: #{fnn_policy_forward.1} parent=0 // pred_region
    _
  $region49: #{fnn_policy_forward.1} parent=0 // pred_fallthru
    _
  // Predicated region
  $region50: #{fnn_policy_forward.1} parent=0 // pred_check
    _
  $region51: #{fnn_policy_forward.1} parent=0 // pred_check_branch
    %647 = sbr.rel (0) target = $region53
  $region52: #{fnn_policy_forward.1} parent=0 // pred_region
    _
  $region53: #{fnn_policy_forward.1} parent=0 // pred_fallthru
    _
  // Predicated region
  $region54: #{fnn_policy_forward.1} parent=0 // pred_check
    _
  $region55: #{fnn_policy_forward.1} parent=0 // pred_check_branch
    %649 = sbr.rel (0) target = $region57
  $region56: #{fnn_policy_forward.1} parent=0 // pred_region
    _
  $region57: #{fnn_policy_forward.1} parent=0 // pred_fallthru
    _

</llo_original>
